<compile_context>
chip_gen: v6e
topology: v6e:2x2x1
jax: 0.10.0
libtpu: 0.0.40
codegen_flags: <defaults>
</compile_context>

<pallas_src>
import jax
import jax.numpy as jnp
from jax.experimental import pallas as pl
from jax.experimental.pallas import tpu as pltpu

LANE = 128


def vae_lr_kernel(x_ref, eps_ref,
                  w1_ref, b1_ref,
                  w2_ref, b2_ref,
                  wcat_ref, mask_ref, fold_ref, group_ref,
                  blr_ref, wlin_ref, blin_ref,
                  wmean_ref, bmean_ref,
                  out_ref):
    """Whole VAE_LR forward, all T snapshots batched on the M axis.

    Shapes (T snapshots, B = T // pre_len, P = pre_len, N nodes, F/H/L feats,
    O = out_feat):
      x_ref     [T, N*F]        eps_ref [T, 128]   (zero-padded past N*L cols)
      w1_ref    [N*F, N*H]      = kron(A_norm^T, W_gc1)
      w2_ref    [N*H, 2*128]    = [kron(A^T, W_mu) | pad | kron(A^T, W_logvar) | pad]
      wcat_ref  [128, P*O]      wcat[j, p*O+o] = W_lr[p*N*L + j, o]
      mask_ref  [T, P*O]        mask[t, p*O+o] = (p == t % P)
      fold_ref  [P*O, O]        vertically tiled I_O (sum over p)
      group_ref [B, T]          group[b, t] = (t // P == b)
      wlin_ref  [O, 128]        final Linear, padded to 128 lanes (col 0 real)
      wmean_ref [N*H, 128]      (1/T) * [kron(A^T,W_mu) | kron(A^T,W_logvar) | pad]
      out_ref   [B+1, 128]      rows 0..B-1: output (col 0); row B: mu|logvar means
    """
    B = group_ref.shape[0]

    # gc1 for ALL T snapshots: pre_len sits on the row axis -> ONE MXU matmul.
    h = jnp.dot(x_ref[...], w1_ref[...],
                preferred_element_type=jnp.float32) + b1_ref[...]      # [T, N*H]

    # mu.mean(0) / logvar.mean(0): depends only on h, so it issues concurrently
    # with the heads -> z -> LR dependent chain (head weights + 1/T folded into
    # wmean wrapper-side).
    colsum_h = jnp.sum(h, axis=0, keepdims=True)                        # [1, N*H]
    means = jnp.dot(colsum_h, wmean_ref[...],
                    preferred_element_type=jnp.float32) + bmean_ref[...]  # [1, 128]

    # Fused, 128-lane padded mu | logvar heads: ONE matmul, lane-aligned split.
    heads = jnp.dot(h, w2_ref[...],
                    preferred_element_type=jnp.float32) + b2_ref[...]   # [T, 256]
    mu = heads[:, :LANE]
    lv = heads[:, LANE:]

    # Reparameterization: z = mu + eps * exp(0.5 * logvar)  (exp on the EUP).
    # Padded columns stay exactly zero (zero weights/bias/eps there).
    z = mu + eps_ref[...] * jnp.exp(0.5 * lv)                           # [T, 128]

    # LR regressor.  The Linear consumes the P snapshots of each batch group
    # concatenated ([B, P*N*L]).  Instead of an in-kernel reshape, the regroup
    # is three tiny matmuls against precomputed selection constants:
    #   y[t, p*O+o] = z[t, :] . W_lr_block_p[:, o]
    #   y *= mask            -> keep only the block with p == t % P
    #   per_t = y @ fold_o   -> [T, O]  (collapse the p blocks)
    #   pre   = group @ per_t-> [B, O]  (sum the P snapshots of each group)
    y = jnp.dot(z, wcat_ref[...],
                preferred_element_type=jnp.float32) * mask_ref[...]     # [T, P*O]
    per_t = jnp.dot(y, fold_ref[...], preferred_element_type=jnp.float32)
    pre = jnp.dot(group_ref[...], per_t,
                  preferred_element_type=jnp.float32) + blr_ref[...]    # [B, O]

    # Numerically-stable sigmoid on the EUP (no overflow for large |pre|).
    sig = 0.5 * (jnp.tanh(0.5 * pre) + 1.0)

    # Final Linear(out_feat, 1), padded to 128 output lanes (col 0 is real).
    out = jnp.dot(sig, wlin_ref[...],
                  preferred_element_type=jnp.float32) + blin_ref[...]   # [B, 128]

    # Single lane-dense output block, written back with one DMA.
    out_ref[0:B, :] = out
    out_ref[B:B + 1, :] = means

    # TODO(synk): VAE.inner_product(z) (sigmoid(z_mean @ z_mean.T)) is computed
    # by VAE.forward but never consumed by VAE_LR (and is broken upstream since
    # adj_shape=None is passed to VAE); intentionally omitted.


def pack_vae_lr_params(params, a_norm, *, T, pre_len):
    """One-time weight/layout packing (call once at init, NOT per forward)."""
    (wg, bg, wmu, bmu, wlv, blv, wlr, blr, wlin, blin) = params
    N = a_norm.shape[0]
    H = wg.shape[1]
    L = wmu.shape[1]
    O = wlr.shape[1]
    P = pre_len
    assert T % P == 0
    B = T // P
    NL = N * L
    assert 2 * NL <= LANE and P * O <= LANE, "toy-shape packing; widen pads to scale"

    f32 = jnp.float32
    at = a_norm.T.astype(f32)

    def pad_cols(w, width):
        return jnp.pad(w, ((0, 0), (0, width - w.shape[1])))

    # gc1 (A-propagation folded into the weight; NO block-diagonal I_P factor).
    w1 = jnp.kron(at, wg.astype(f32))                                  # [N*F, N*H]
    b1 = jnp.tile(bg.astype(f32), (N,))[None, :]                       # [1, N*H]

    # mu / logvar heads, each padded to its own 128-lane block.
    wmu_f = jnp.kron(at, wmu.astype(f32))                              # [N*H, NL]
    wlv_f = jnp.kron(at, wlv.astype(f32))
    bmu_f = jnp.tile(bmu.astype(f32), (N,))[None, :]                   # [1, NL]
    blv_f = jnp.tile(blv.astype(f32), (N,))[None, :]
    w2 = jnp.concatenate([pad_cols(wmu_f, LANE), pad_cols(wlv_f, LANE)], axis=1)
    b2 = jnp.concatenate([pad_cols(bmu_f, LANE), pad_cols(blv_f, LANE)], axis=1)

    # LR regroup constants (z [T, NL] -> zf [B, P*NL] expressed as matmuls).
    wcat = jnp.transpose(wlr.astype(f32).reshape(P, NL, O), (1, 0, 2)).reshape(NL, P * O)
    wcat = jnp.pad(wcat, ((0, LANE - NL), (0, 0)))                     # [128, P*O]
    t_ids = jnp.arange(T)
    p_ids = jnp.repeat(jnp.arange(P), O)
    mask = (p_ids[None, :] == (t_ids % P)[:, None]).astype(f32)        # [T, P*O]
    fold_o = jnp.tile(jnp.eye(O, dtype=f32), (P, 1))                   # [P*O, O]
    group = (jnp.arange(B)[:, None] == (t_ids // P)[None, :]).astype(f32)  # [B, T]
    blr2 = blr.astype(f32)[None, :]                                    # [1, O]

    # Final Linear padded to 128 output lanes.
    wlin_p = pad_cols(wlin.astype(f32), LANE)                          # [O, 128]
    blin_p = pad_cols(blin.astype(f32)[None, :], LANE)                 # [1, 128]

    # mu/logvar means straight from colsum(h): head weights and 1/T folded in.
    wmean = pad_cols(jnp.concatenate([wmu_f, wlv_f], axis=1) / T, LANE)  # [N*H, 128]
    bmean = pad_cols(jnp.concatenate([bmu_f, blv_f], axis=1), LANE)      # [1, 128]

    return dict(w1=w1, b1=b1, w2=w2, b2=b2, wcat=wcat, mask=mask,
                fold_o=fold_o, group=group, blr=blr2, wlin=wlin_p,
                blin=blin_p, wmean=wmean, bmean=bmean)


def vae_lr_forward(x, eps, packed, *, pre_len):
    """Per-call wrapper: only reshapes/pads per-call data, then one pallas_call."""
    T, N, F = x.shape
    L = eps.shape[-1]
    P = pre_len
    B = T // P
    NL = N * L

    x_r = x.reshape(T, N * F).astype(jnp.float32)                      # lane-dense rows
    eps_r = jnp.pad(eps.reshape(T, NL).astype(jnp.float32),
                    ((0, 0), (0, LANE - NL)))                          # [T, 128]

    operands = (x_r, eps_r,
                packed["w1"], packed["b1"], packed["w2"], packed["b2"],
                packed["wcat"], packed["mask"], packed["fold_o"], packed["group"],
                packed["blr"], packed["wlin"], packed["blin"],
                packed["wmean"], packed["bmean"])

    NH = packed["w1"].shape[1]
    O = packed["blr"].shape[1]
    flops = 2 * (T * (N * F) * NH          # gc1
                 + NH * LANE               # means
                 + T * NH * 2 * LANE       # heads
                 + T * LANE * P * O        # wcat
                 + T * P * O * O           # fold_o
                 + B * T * O               # group
                 + B * O * LANE)           # final linear
    transcendentals = T * LANE + B * O
    bytes_accessed = 4 * (sum(int(a.size) for a in operands) + (B + 1) * LANE)

    vmem = pl.BlockSpec(memory_space=pltpu.MemorySpace.VMEM)
    block = pl.pallas_call(
        vae_lr_kernel,
        out_shape=jax.ShapeDtypeStruct((B + 1, LANE), jnp.float32),
        in_specs=[vmem] * len(operands),
        out_specs=vmem,
        cost_estimate=pl.CostEstimate(flops=flops,
                                      transcendentals=transcendentals,
                                      bytes_accessed=bytes_accessed),
        # ~100 KB total resident data -> single grid step, default VMEM limits
        # are fine on v5e/v6e/v7x.  When scaling N/T up: grid over T marked
        # "parallel" (2 TCs on v7x), bf16 weights, and set
        # pltpu.CompilerParams(vmem_limit_bytes=...) against v7x's 64 MiB VMEM.
    )(*operands)

    out = block[:B, :1]                              # [B, 1] module output
    mu_mean = block[B, :NL].reshape(N, L)
    lv_mean = block[B, NL:2 * NL].reshape(N, L)
    return out, mu_mean, lv_mean


def reference_forward(x, a_norm, eps, params, *, pre_len):
    """Pure-JAX reference of the same semantics (correctness check)."""
    (wg, bg, wmu, bmu, wlv, blv, wlr, blr, wlin, blin) = params
    h = jnp.einsum('nm,tmh->tnh', a_norm, x @ wg) + bg
    mu = jnp.einsum('nm,tml->tnl', a_norm, h @ wmu) + bmu
    lv = jnp.einsum('nm,tml->tnl', a_norm, h @ wlv) + blv
    z = mu + eps * jnp.exp(0.5 * lv)
    lr_infeat = wlr.shape[0]
    zf = z.reshape(-1, lr_infeat)
    out = jax.nn.sigmoid(zf @ wlr + blr)
    out = out @ wlin + blin
    return out, mu.mean(0), lv.mean(0)


if __name__ == "__main__":
    # --- small shapes consistent with VAE_LR.__init__ defaults ---
    in_feat = 4        # n_feat
    G_hidden = 2       # n_hid
    G_latent = 1       # n_latent
    pre_len = 5
    out_feat = 4
    N = 8              # adj_shape = max(edge_index) + 1
    T = 2 * pre_len    # number of graph snapshots (multiple of pre_len)

    key = jax.random.PRNGKey(0)
    keys = jax.random.split(key, 12)

    # ring graph edge_index [2, 2N] -> dense GCN-normalized adjacency (glue)
    src = jnp.concatenate([jnp.arange(N), (jnp.arange(N) + 1) % N])
    dst = jnp.concatenate([(jnp.arange(N) + 1) % N, jnp.arange(N)])
    edge_index = jnp.stack([src, dst]).astype(jnp.int32)
    adj_shape = int(jnp.max(edge_index.reshape(-1))) + 1
    assert adj_shape == N
    A = jnp.zeros((N, N), jnp.float32).at[edge_index[0], edge_index[1]].set(1.0)
    A = A + jnp.eye(N, dtype=jnp.float32)
    dinv = 1.0 / jnp.sqrt(A.sum(axis=1))
    a_norm = dinv[:, None] * A * dinv[None, :]

    lr_infeat = G_latent * adj_shape * pre_len

    # deterministic parameter init ([in, out] layout; equivalent to nn.Linear)
    params = (
        0.3 * jax.random.normal(keys[0], (in_feat, G_hidden), jnp.float32),   # gc1 W
        0.1 * jax.random.normal(keys[1], (G_hidden,), jnp.float32),           # gc1 b
        0.3 * jax.random.normal(keys[2], (G_hidden, G_latent), jnp.float32),  # mu W
        0.1 * jax.random.normal(keys[3], (G_latent,), jnp.float32),           # mu b
        0.3 * jax.random.normal(keys[4], (G_hidden, G_latent), jnp.float32),  # logvar W
        0.1 * jax.random.normal(keys[5], (G_latent,), jnp.float32),           # logvar b
        0.3 * jax.random.normal(keys[6], (lr_infeat, out_feat), jnp.float32), # LR W
        0.1 * jax.random.normal(keys[7], (out_feat,), jnp.float32),           # LR b
        0.3 * jax.random.normal(keys[8], (out_feat, 1), jnp.float32),         # final W
        0.1 * jax.random.normal(keys[9], (1,), jnp.float32),                  # final b
    )

    x = jax.random.normal(keys[10], (T, N, in_feat), jnp.float32)
    # torch.randn_like(std) inside encode() -> explicit deterministic eps input
    eps = jax.random.normal(keys[11], (T, N, G_latent), jnp.float32)

    # One-time packing (cached); jitted per-call forward.
    packed = pack_vae_lr_params(params, a_norm, T=T, pre_len=pre_len)
    packed = jax.tree_util.tree_map(jax.block_until_ready, packed)
    forward = jax.jit(vae_lr_forward, static_argnames=("pre_len",))

    out, mu_mean, lv_mean = forward(x, eps, packed, pre_len=pre_len)
    jax.block_until_ready((out, mu_mean, lv_mean))

    ref_out, ref_mu, ref_lv = reference_forward(x, a_norm, eps, params, pre_len=pre_len)
    ok = (jnp.allclose(out, ref_out, rtol=1e-3, atol=1e-4)
          and jnp.allclose(mu_mean, ref_mu, rtol=1e-3, atol=1e-5)
          and jnp.allclose(lv_mean, ref_lv, rtol=1e-3, atol=1e-5))
    if not bool(ok):
        raise AssertionError("Pallas kernel does not match pure-JAX reference")

    print("KERNEL_OK")
</pallas_src>

<mosaic_0001>
module attributes {stable_mosaic.version = 11 : i64} {
  func.func @vae_lr_kernel(%arg0: memref<10x32xf32, #tpu.memory_space<vmem>>, %arg1: memref<10x128xf32, #tpu.memory_space<vmem>>, %arg2: memref<32x16xf32, #tpu.memory_space<vmem>>, %arg3: memref<1x16xf32, #tpu.memory_space<vmem>>, %arg4: memref<16x256xf32, #tpu.memory_space<vmem>>, %arg5: memref<1x256xf32, #tpu.memory_space<vmem>>, %arg6: memref<128x20xf32, #tpu.memory_space<vmem>>, %arg7: memref<10x20xf32, #tpu.memory_space<vmem>>, %arg8: memref<20x4xf32, #tpu.memory_space<vmem>>, %arg9: memref<2x10xf32, #tpu.memory_space<vmem>>, %arg10: memref<1x4xf32, #tpu.memory_space<vmem>>, %arg11: memref<4x128xf32, #tpu.memory_space<vmem>>, %arg12: memref<1x128xf32, #tpu.memory_space<vmem>>, %arg13: memref<16x128xf32, #tpu.memory_space<vmem>>, %arg14: memref<1x128xf32, #tpu.memory_space<vmem>>, %arg15: memref<3x128xf32, #tpu.memory_space<vmem>>) attributes {dimension_semantics = [], scalar_prefetch = 0 : i64, scratch_operands = 0 : i64, tpu.core_type = #tpu.core_type<tc>} {
    %c0 = arith.constant 0 : index
    %c0_0 = arith.constant 0 : index
    %0 = vector.load %arg0[%c0, %c0_0] : memref<10x32xf32, #tpu.memory_space<vmem>>, vector<10x32xf32>
    %c0_1 = arith.constant 0 : index
    %c0_2 = arith.constant 0 : index
    %1 = vector.load %arg2[%c0_1, %c0_2] : memref<32x16xf32, #tpu.memory_space<vmem>>, vector<32x16xf32>
    %cst = arith.constant dense<0.000000e+00> : vector<10x16xf32>
    %2 = tpu.matmul %0, %1, %cst {dimension_numbers = #tpu.dot_dimension_numbers<[1], [0], [0], [1], [0, 0, 1, 1], [], []>} : vector<10x32xf32>, vector<32x16xf32>, vector<10x16xf32> -> vector<10x16xf32>
    %c0_3 = arith.constant 0 : index
    %c0_4 = arith.constant 0 : index
    %3 = vector.load %arg3[%c0_3, %c0_4] : memref<1x16xf32, #tpu.memory_space<vmem>>, vector<1x16xf32>
    %4 = vector.broadcast %3 : vector<1x16xf32> to vector<10x16xf32>
    %5 = arith.addf %2, %4 : vector<10x16xf32>
    %cst_5 = arith.constant dense<0.000000e+00> : vector<16xf32>
    %6 = vector.multi_reduction <add>, %5, %cst_5 [0] : vector<10x16xf32> to vector<16xf32>
    %7 = vector.shape_cast %6 : vector<16xf32> to vector<1x16xf32>
    %c0_6 = arith.constant 0 : index
    %c0_7 = arith.constant 0 : index
    %8 = vector.load %arg13[%c0_6, %c0_7] : memref<16x128xf32, #tpu.memory_space<vmem>>, vector<16x128xf32>
    %cst_8 = arith.constant dense<0.000000e+00> : vector<1x128xf32>
    %9 = tpu.matmul %7, %8, %cst_8 {dimension_numbers = #tpu.dot_dimension_numbers<[1], [0], [0], [1], [0, 0, 1, 1], [], []>} : vector<1x16xf32>, vector<16x128xf32>, vector<1x128xf32> -> vector<1x128xf32>
    %c0_9 = arith.constant 0 : index
    %c0_10 = arith.constant 0 : index
    %10 = vector.load %arg14[%c0_9, %c0_10] : memref<1x128xf32, #tpu.memory_space<vmem>>, vector<1x128xf32>
    %11 = arith.addf %9, %10 : vector<1x128xf32>
    %c0_11 = arith.constant 0 : index
    %c0_12 = arith.constant 0 : index
    %12 = vector.load %arg4[%c0_11, %c0_12] : memref<16x256xf32, #tpu.memory_space<vmem>>, vector<16x256xf32>
    %cst_13 = arith.constant dense<0.000000e+00> : vector<10x256xf32>
    %13 = tpu.matmul %5, %12, %cst_13 {dimension_numbers = #tpu.dot_dimension_numbers<[1], [0], [0], [1], [0, 0, 1, 1], [], []>} : vector<10x16xf32>, vector<16x256xf32>, vector<10x256xf32> -> vector<10x256xf32>
    %c0_14 = arith.constant 0 : index
    %c0_15 = arith.constant 0 : index
    %14 = vector.load %arg5[%c0_14, %c0_15] : memref<1x256xf32, #tpu.memory_space<vmem>>, vector<1x256xf32>
    %15 = vector.broadcast %14 : vector<1x256xf32> to vector<10x256xf32>
    %16 = arith.addf %13, %15 : vector<10x256xf32>
    %17 = vector.extract_strided_slice %16 {offsets = [0, 0], sizes = [10, 128], strides = [1, 1]} : vector<10x256xf32> to vector<10x128xf32>
    %18 = vector.extract_strided_slice %16 {offsets = [0, 128], sizes = [10, 128], strides = [1, 1]} : vector<10x256xf32> to vector<10x128xf32>
    %c0_16 = arith.constant 0 : index
    %c0_17 = arith.constant 0 : index
    %19 = vector.load %arg1[%c0_16, %c0_17] : memref<10x128xf32, #tpu.memory_space<vmem>>, vector<10x128xf32>
    %cst_18 = arith.constant 5.000000e-01 : f32
    %20 = vector.broadcast %cst_18 : f32 to vector<10x128xf32>
    %21 = arith.mulf %20, %18 : vector<10x128xf32>
    %22 = math.exp %21 : vector<10x128xf32>
    %23 = arith.mulf %19, %22 : vector<10x128xf32>
    %24 = arith.addf %17, %23 : vector<10x128xf32>
    %c0_19 = arith.constant 0 : index
    %c0_20 = arith.constant 0 : index
    %25 = vector.load %arg6[%c0_19, %c0_20] : memref<128x20xf32, #tpu.memory_space<vmem>>, vector<128x20xf32>
    %cst_21 = arith.constant dense<0.000000e+00> : vector<10x20xf32>
    %26 = tpu.matmul %24, %25, %cst_21 {dimension_numbers = #tpu.dot_dimension_numbers<[1], [0], [0], [1], [0, 0, 1, 1], [], []>} : vector<10x128xf32>, vector<128x20xf32>, vector<10x20xf32> -> vector<10x20xf32>
    %c0_22 = arith.constant 0 : index
    %c0_23 = arith.constant 0 : index
    %27 = vector.load %arg7[%c0_22, %c0_23] : memref<10x20xf32, #tpu.memory_space<vmem>>, vector<10x20xf32>
    %28 = arith.mulf %26, %27 : vector<10x20xf32>
    %c0_24 = arith.constant 0 : index
    %c0_25 = arith.constant 0 : index
    %29 = vector.load %arg8[%c0_24, %c0_25] : memref<20x4xf32, #tpu.memory_space<vmem>>, vector<20x4xf32>
    %cst_26 = arith.constant dense<0.000000e+00> : vector<10x4xf32>
    %30 = tpu.matmul %28, %29, %cst_26 {dimension_numbers = #tpu.dot_dimension_numbers<[1], [0], [0], [1], [0, 0, 1, 1], [], []>} : vector<10x20xf32>, vector<20x4xf32>, vector<10x4xf32> -> vector<10x4xf32>
    %c0_27 = arith.constant 0 : index
    %c0_28 = arith.constant 0 : index
    %31 = vector.load %arg9[%c0_27, %c0_28] : memref<2x10xf32, #tpu.memory_space<vmem>>, vector<2x10xf32>
    %cst_29 = arith.constant dense<0.000000e+00> : vector<2x4xf32>
    %32 = tpu.matmul %31, %30, %cst_29 {dimension_numbers = #tpu.dot_dimension_numbers<[1], [0], [0], [1], [0, 0, 1, 1], [], []>} : vector<2x10xf32>, vector<10x4xf32>, vector<2x4xf32> -> vector<2x4xf32>
    %c0_30 = arith.constant 0 : index
    %c0_31 = arith.constant 0 : index
    %33 = vector.load %arg10[%c0_30, %c0_31] : memref<1x4xf32, #tpu.memory_space<vmem>>, vector<1x4xf32>
    %34 = vector.broadcast %33 : vector<1x4xf32> to vector<2x4xf32>
    %35 = arith.addf %32, %34 : vector<2x4xf32>
    %cst_32 = arith.constant 5.000000e-01 : f32
    %36 = vector.broadcast %cst_32 : f32 to vector<2x4xf32>
    %37 = arith.mulf %36, %35 : vector<2x4xf32>
    %38 = math.tanh %37 : vector<2x4xf32>
    %cst_33 = arith.constant 1.000000e+00 : f32
    %39 = vector.broadcast %cst_33 : f32 to vector<2x4xf32>
    %40 = arith.addf %38, %39 : vector<2x4xf32>
    %cst_34 = arith.constant 5.000000e-01 : f32
    %41 = vector.broadcast %cst_34 : f32 to vector<2x4xf32>
    %42 = arith.mulf %41, %40 : vector<2x4xf32>
    %c0_35 = arith.constant 0 : index
    %c0_36 = arith.constant 0 : index
    %43 = vector.load %arg11[%c0_35, %c0_36] : memref<4x128xf32, #tpu.memory_space<vmem>>, vector<4x128xf32>
    %cst_37 = arith.constant dense<0.000000e+00> : vector<2x128xf32>
    %44 = tpu.matmul %42, %43, %cst_37 {dimension_numbers = #tpu.dot_dimension_numbers<[1], [0], [0], [1], [0, 0, 1, 1], [], []>} : vector<2x4xf32>, vector<4x128xf32>, vector<2x128xf32> -> vector<2x128xf32>
    %c0_38 = arith.constant 0 : index
    %c0_39 = arith.constant 0 : index
    %45 = vector.load %arg12[%c0_38, %c0_39] : memref<1x128xf32, #tpu.memory_space<vmem>>, vector<1x128xf32>
    %46 = vector.broadcast %45 : vector<1x128xf32> to vector<2x128xf32>
    %47 = arith.addf %44, %46 : vector<2x128xf32>
    %c0_40 = arith.constant 0 : index
    %c0_41 = arith.constant 0 : index
    %48 = vector.load %arg15[%c0_40, %c0_41] : memref<3x128xf32, #tpu.memory_space<vmem>>, vector<2x128xf32>
    tpu.vector_store %arg15[%c0_40, %c0_41], %47 {strides = array<i32>} : memref<3x128xf32, #tpu.memory_space<vmem>>, vector<2x128xf32>,
    %c2 = arith.constant 2 : index
    %c0_42 = arith.constant 0 : index
    %49 = vector.load %arg15[%c2, %c0_42] : memref<3x128xf32, #tpu.memory_space<vmem>>, vector<1x128xf32>
    tpu.vector_store %arg15[%c2, %c0_42], %11 {strides = array<i32>} : memref<3x128xf32, #tpu.memory_space<vmem>>, vector<1x128xf32>,
    return
  }
}

</mosaic_0001>

<llo_original>
// kernel: vae_lr_forward.1
$region0: #{vae_lr_forward.1}
  #allocation0 [shape = 'u32[]', space=smem, size = 0x4, offset = 0x4, fixed_abs, tag = 'smem constant byte address 0x4 - core index']
  #allocation1 [shape = 'u32[144,128]{1,0:T(1,128)}', space=vmem, size = 0x12000, scoped, tag = 'internal scratch']
  %s0 = inlined_call_operand.vmem [shape: f32[10,32], index: 0, kind: input, shape index: {}]
  %s1 = inlined_call_operand.vmem [shape: f32[10,128], index: 1, kind: input, shape index: {}]
  %s2 = inlined_call_operand.vmem [shape: f32[32,16], index: 2, kind: input, shape index: {}]
  %s3 = inlined_call_operand.vmem [shape: f32[1,16], index: 3, kind: input, shape index: {}]
  %s4 = inlined_call_operand.vmem [shape: f32[16,256], index: 4, kind: input, shape index: {}]
  %s5 = inlined_call_operand.vmem [shape: f32[1,256], index: 5, kind: input, shape index: {}]
  %s6 = inlined_call_operand.vmem [shape: f32[128,20], index: 6, kind: input, shape index: {}]
  %s7 = inlined_call_operand.vmem [shape: f32[10,20], index: 7, kind: input, shape index: {}]
  %s8 = inlined_call_operand.vmem [shape: f32[20,4], index: 8, kind: input, shape index: {}]
  %s9 = inlined_call_operand.vmem [shape: f32[2,10], index: 9, kind: input, shape index: {}]
  %s10 = inlined_call_operand.vmem [shape: f32[1,4], index: 10, kind: input, shape index: {}]
  %s11 = inlined_call_operand.vmem [shape: f32[4,128], index: 11, kind: input, shape index: {}]
  %s12 = inlined_call_operand.vmem [shape: f32[1,128], index: 12, kind: input, shape index: {}]
  %s13 = inlined_call_operand.vmem [shape: f32[16,128], index: 13, kind: input, shape index: {}]
  %s14 = inlined_call_operand.vmem [shape: f32[1,128], index: 14, kind: input, shape index: {}]
  %s15 = inlined_call_operand.vmem [shape: f32[3,128], index: 15, kind: output, shape index: {}]
  %s16 = sld [smem:[#allocation0]]
  $region70: #{vae_lr_forward.1} parent=0
    _
  %s18 = ssub.s32 1, %s16
  %s19 = scalar_select 0, %s18, %s16
  // Predicated region
  $region2: #{vae_lr_forward.1} parent=0 // pred_check
    _
  $region3: #{vae_lr_forward.1} parent=0 // pred_check_branch
    %21 = sbr.rel (0) target = $region5
  $region4: #{vae_lr_forward.1} parent=0 // pred_region
    _
  $region5: #{vae_lr_forward.1} parent=0 // pred_fallthru
    _
  // Predicated region
  $region6: #{vae_lr_forward.1} parent=0 // pred_check
    _
  $region7: #{vae_lr_forward.1} parent=0 // pred_check_branch
    %23 = sbr.rel (0) target = $region9
  $region8: #{vae_lr_forward.1} parent=0 // pred_region
    _
  $region9: #{vae_lr_forward.1} parent=0 // pred_fallthru
    _
  // Predicated region
  $region10: #{vae_lr_forward.1} parent=0 // pred_check
    _
  $region11: #{vae_lr_forward.1} parent=0 // pred_check_branch
    %25 = sbr.rel (0) target = $region13
  $region12: #{vae_lr_forward.1} parent=0 // pred_region
    _
  $region13: #{vae_lr_forward.1} parent=0 // pred_fallthru
    _
  // Predicated region
  $region14: #{vae_lr_forward.1} parent=0 // pred_check
    _
  $region15: #{vae_lr_forward.1} parent=0 // pred_check_branch
    %27 = sbr.rel (0) target = $region17
  $region16: #{vae_lr_forward.1} parent=0 // pred_region
    _
  $region17: #{vae_lr_forward.1} parent=0 // pred_fallthru
    _
  // Predicated region
  $region18: #{vae_lr_forward.1} parent=0 // pred_check
    _
  $region19: #{vae_lr_forward.1} parent=0 // pred_check_branch
    %29 = sbr.rel (0) target = $region21
  $region20: #{vae_lr_forward.1} parent=0 // pred_region
    _
  $region21: #{vae_lr_forward.1} parent=0 // pred_fallthru
    _
  // Predicated region
  $region22: #{vae_lr_forward.1} parent=0 // pred_check
    _
  $region23: #{vae_lr_forward.1} parent=0 // pred_check_branch
    %31 = sbr.rel (0) target = $region25
  $region24: #{vae_lr_forward.1} parent=0 // pred_region
    _
  $region25: #{vae_lr_forward.1} parent=0 // pred_fallthru
    _
  // Predicated region
  $region26: #{vae_lr_forward.1} parent=0 // pred_check
    _
  $region27: #{vae_lr_forward.1} parent=0 // pred_check_branch
    %33 = sbr.rel (0) target = $region29
  $region28: #{vae_lr_forward.1} parent=0 // pred_region
    _
  $region29: #{vae_lr_forward.1} parent=0 // pred_fallthru
    _
  // Predicated region
  $region30: #{vae_lr_forward.1} parent=0 // pred_check
    _
  $region31: #{vae_lr_forward.1} parent=0 // pred_check_branch
    %35 = sbr.rel (0) target = $region33
  $region32: #{vae_lr_forward.1} parent=0 // pred_region
    _
  $region33: #{vae_lr_forward.1} parent=0 // pred_fallthru
    _
  // Predicated region
  $region34: #{vae_lr_forward.1} parent=0 // pred_check
    _
  $region35: #{vae_lr_forward.1} parent=0 // pred_check_branch
    %37 = sbr.rel (0) target = $region37
  $region36: #{vae_lr_forward.1} parent=0 // pred_region
    _
  $region37: #{vae_lr_forward.1} parent=0 // pred_fallthru
    _
  // Predicated region
  $region38: #{vae_lr_forward.1} parent=0 // pred_check
    _
  $region39: #{vae_lr_forward.1} parent=0 // pred_check_branch
    %39 = sbr.rel (0) target = $region41
  $region40: #{vae_lr_forward.1} parent=0 // pred_region
    _
  $region41: #{vae_lr_forward.1} parent=0 // pred_fallthru
    _
  // Predicated region
  $region42: #{vae_lr_forward.1} parent=0 // pred_check
    _
  $region43: #{vae_lr_forward.1} parent=0 // pred_check_branch
    %41 = sbr.rel (0) target = $region45
  $region44: #{vae_lr_forward.1} parent=0 // pred_region
    _
  $region45: #{vae_lr_forward.1} parent=0 // pred_fallthru
    _
  // Predicated region
  $region46: #{vae_lr_forward.1} parent=0 // pred_check
    _
  $region47: #{vae_lr_forward.1} parent=0 // pred_check_branch
    %43 = sbr.rel (0) target = $region49
  $region48: #{vae_lr_forward.1} parent=0 // pred_region
    _
  $region49: #{vae_lr_forward.1} parent=0 // pred_fallthru
    _
  // Predicated region
  $region50: #{vae_lr_forward.1} parent=0 // pred_check
    _
  $region51: #{vae_lr_forward.1} parent=0 // pred_check_branch
    %45 = sbr.rel (0) target = $region53
  $region52: #{vae_lr_forward.1} parent=0 // pred_region
    _
  $region53: #{vae_lr_forward.1} parent=0 // pred_fallthru
    _
  // Predicated region
  $region54: #{vae_lr_forward.1} parent=0 // pred_check
    _
  $region55: #{vae_lr_forward.1} parent=0 // pred_check_branch
    %47 = sbr.rel (0) target = $region57
  $region56: #{vae_lr_forward.1} parent=0 // pred_region
    _
  $region57: #{vae_lr_forward.1} parent=0 // pred_fallthru
    _
  // Predicated region
  $region58: #{vae_lr_forward.1} parent=0 // pred_check
    _
  $region59: #{vae_lr_forward.1} parent=0 // pred_check_branch
    %49 = sbr.rel (0) target = $region61
  $region60: #{vae_lr_forward.1} parent=0 // pred_region
    _
  $region61: #{vae_lr_forward.1} parent=0 // pred_fallthru
    _
  %v50 = vld [vmem:[%s0] sm:$0xff]
  %v51 = vld [vmem:[%s0 + $0x8] sm:$0x3]
  %v52 = vld [vmem:[%s2] sm:$0xff]
  %v53 = vld [vmem:[%s2 + $0x8] sm:$0xff]
  %v54 = vld [vmem:[%s2 + $0x10] sm:$0xff]
  %v55 = vld [vmem:[%s2 + $0x18] sm:$0xff]
  %v56 = vld [vmem:[%s3] sm:$0x1]
  %v58 = vlaneseq
  %v59 = vshrl.u32 %v58, 7
  %v60 = vsub.s32 0, %v59
  %v61 = vrot.slane %v56, %v60
  %vm63 = vcmask 261120
  %v65 = vsel %vm63, %v50, 0
  %v68 = vsel %vm63, %v51, 0
  %70 = vmatprep.subr.mxu0 0.0
  %71 = vmatpush1.msra.mxu0 0.0
  %72 = vmatprep.subr.mxu0 0.0
  %73 = vmatpush1.msra.mxu0 0.0
  %74 = vmatprep.subr.mxu0 0.0
  %75 = vmatpush1.msra.mxu0 0.0
  %76 = vmatprep.subr.mxu0 0.0
  %77 = vmatpush1.msra.mxu0 0.0
  %78 = vmatprep.subr.mxu0 0.0
  %79 = vmatpush1.msra.mxu0 0.0
  %80 = vmatprep.subr.mxu0 0.0
  %81 = vmatpush1.msra.mxu0 0.0
  %82 = vmatprep.subr.mxu0 0.0
  %83 = vmatpush1.msra.mxu0 0.0
  %84 = vmatprep.subr.mxu0 0.0
  %85 = vmatpush1.msra.mxu0 0.0
  %86 = vmatprep.subr.mxu0 0.0
  %87 = vmatpush1.msra.mxu0 0.0
  %88 = vmatprep.subr.mxu0 0.0
  %89 = vmatpush1.msra.mxu0 0.0
  %90 = vmatprep.subr.mxu0 0.0
  %91 = vmatpush1.msra.mxu0 0.0
  %92 = vmatprep.subr.mxu0 0.0
  %93 = vmatpush1.msra.mxu0 0.0
  %94 = vmatprep.subr.mxu0 0.0
  %95 = vmatpush1.msra.mxu0 %v55
  %96 = vmatprep.subr.mxu0 0.0
  %97 = vmatpush1.msra.mxu0 %v54
  %98 = vmatprep.subr.mxu0 0.0
  %99 = vmatpush1.msra.mxu0 %v53
  %100 = vmatprep.subr.mxu0 0.0
  %101 = vmatpush1.msra.mxu0 %v52
  %102 = vmatprep.subr.mxu0 0.0
  %103 = vmatpush2.msra.mxu0 0.0
  %104 = vmatprep.subr.mxu0 0.0
  %105 = vmatpush2.msra.mxu0 0.0
  %106 = vmatprep.subr.mxu0 0.0
  %107 = vmatpush2.msra.mxu0 0.0
  %108 = vmatprep.subr.mxu0 0.0
  %109 = vmatpush2.msra.mxu0 0.0
  %110 = vmatprep.subr.mxu0 0.0
  %111 = vmatpush2.msra.mxu0 0.0
  %112 = vmatprep.subr.mxu0 0.0
  %113 = vmatpush2.msra.mxu0 0.0
  %114 = vmatprep.subr.mxu0 0.0
  %115 = vmatpush2.msra.mxu0 0.0
  %116 = vmatprep.subr.mxu0 0.0
  %117 = vmatpush2.msra.mxu0 0.0
  %118 = vmatprep.subr.mxu0 0.0
  %119 = vmatpush2.msra.mxu0 0.0
  %120 = vmatprep.subr.mxu0 0.0
  %121 = vmatpush2.msra.mxu0 0.0
  %122 = vmatprep.subr.mxu0 0.0
  %123 = vmatpush2.msra.mxu0 0.0
  %124 = vmatprep.subr.mxu0 0.0
  %125 = vmatpush2.msra.mxu0 0.0
  %126 = vmatprep.subr.mxu0 0.0
  %127 = vmatpush2.msra.mxu0 0.0
  %128 = vmatprep.subr.mxu0 0.0
  %129 = vmatpush2.msra.mxu0 0.0
  %130 = vmatprep.subr.mxu0 0.0
  %131 = vmatpush2.msra.mxu0 0.0
  %132 = vmatprep.subr.mxu0 0.0
  %133 = vmatpush2.msra.mxu0 0.0
  %134 = vmatprep.mubr.f32.mxu0 0.0
  %135 = vmatmul.mubr.f32.gmra.mxu0 %v65
  %v136 = vpop.f32.mrf.mxu0
  %v137 = vadd.f32 %v61, %v136
  %v138 = vpop.f32.mrf.mxu0
  %139 = vmatprep.mubr.f32.mxu0 0.0
  %140 = vmatmul.mubr.f32.gmra.mxu0 %v68
  %v141 = vpop.f32.mrf.mxu0
  %v142 = vadd.f32 %v61, %v141
  %v143 = vpop.f32.mrf.mxu0
  %144 = vdwg.mxu0
  %vm145 = vcmask 130048
  %v146 = vsel %vm145, %v137, 0.0
  %vm147 = vcmask 123904
  %v148 = vsel %vm147, %v142, 0.0
  %v149 = vadd.f32 %v146, %v148
  %v150 = vrot.slane %v149, 4
  %v151 = vadd.f32 %v149, %v150
  %v152 = vrot.slane %v151, 2
  %v153 = vadd.f32 %v151, %v152
  %v154 = vrot.slane %v153, 1
  %v155 = vadd.f32 %v153, %v154
  %v156 = vld [vmem:[%s13] sm:$0xff]
  %v157 = vld [vmem:[%s13 + $0x8] sm:$0xff]
  %v158 = vld [vmem:[%s14] sm:$0x1]
  %v160 = vsel %vm145, %v155, 0
  %162 = vmatprep.subr.mxu0 0.0
  %163 = vmatpush1.msra.mxu0 0.0
  %164 = vmatprep.subr.mxu0 0.0
  %165 = vmatpush1.msra.mxu0 0.0
  %166 = vmatprep.subr.mxu0 0.0
  %167 = vmatpush1.msra.mxu0 0.0
  %168 = vmatprep.subr.mxu0 0.0
  %169 = vmatpush1.msra.mxu0 0.0
  %170 = vmatprep.subr.mxu0 0.0
  %171 = vmatpush1.msra.mxu0 0.0
  %172 = vmatprep.subr.mxu0 0.0
  %173 = vmatpush1.msra.mxu0 0.0
  %174 = vmatprep.subr.mxu0 0.0
  %175 = vmatpush1.msra.mxu0 0.0
  %176 = vmatprep.subr.mxu0 0.0
  %177 = vmatpush1.msra.mxu0 0.0
  %178 = vmatprep.subr.mxu0 0.0
  %179 = vmatpush1.msra.mxu0 0.0
  %180 = vmatprep.subr.mxu0 0.0
  %181 = vmatpush1.msra.mxu0 0.0
  %182 = vmatprep.subr.mxu0 0.0
  %183 = vmatpush1.msra.mxu0 0.0
  %184 = vmatprep.subr.mxu0 0.0
  %185 = vmatpush1.msra.mxu0 0.0
  %186 = vmatprep.subr.mxu0 0.0
  %187 = vmatpush1.msra.mxu0 0.0
  %188 = vmatprep.subr.mxu0 0.0
  %189 = vmatpush1.msra.mxu0 0.0
  %190 = vmatprep.subr.mxu0 0.0
  %191 = vmatpush1.msra.mxu0 %v157
  %192 = vmatprep.subr.mxu0 0.0
  %193 = vmatpush1.msra.mxu0 %v156
  %194 = vmatprep.subr.mxu0 0.0
  %195 = vmatpush2.msra.mxu0 0.0
  %196 = vmatprep.subr.mxu0 0.0
  %197 = vmatpush2.msra.mxu0 0.0
  %198 = vmatprep.subr.mxu0 0.0
  %199 = vmatpush2.msra.mxu0 0.0
  %200 = vmatprep.subr.mxu0 0.0
  %201 = vmatpush2.msra.mxu0 0.0
  %202 = vmatprep.subr.mxu0 0.0
  %203 = vmatpush2.msra.mxu0 0.0
  %204 = vmatprep.subr.mxu0 0.0
  %205 = vmatpush2.msra.mxu0 0.0
  %206 = vmatprep.subr.mxu0 0.0
  %207 = vmatpush2.msra.mxu0 0.0
  %208 = vmatprep.subr.mxu0 0.0
  %209 = vmatpush2.msra.mxu0 0.0
  %210 = vmatprep.subr.mxu0 0.0
  %211 = vmatpush2.msra.mxu0 0.0
  %212 = vmatprep.subr.mxu0 0.0
  %213 = vmatpush2.msra.mxu0 0.0
  %214 = vmatprep.subr.mxu0 0.0
  %215 = vmatpush2.msra.mxu0 0.0
  %216 = vmatprep.subr.mxu0 0.0
  %217 = vmatpush2.msra.mxu0 0.0
  %218 = vmatprep.subr.mxu0 0.0
  %219 = vmatpush2.msra.mxu0 0.0
  %220 = vmatprep.subr.mxu0 0.0
  %221 = vmatpush2.msra.mxu0 0.0
  %222 = vmatprep.subr.mxu0 0.0
  %223 = vmatpush2.msra.mxu0 0.0
  %224 = vmatprep.subr.mxu0 0.0
  %225 = vmatpush2.msra.mxu0 0.0
  %226 = vmatprep.mubr.f32.mxu0 0.0
  %227 = vmatmul.mubr.f32.gmra.mxu0 %v160
  %v228 = vpop.f32.mrf.mxu0
  %v229 = vadd.f32 %v158, %v228
  %v230 = vpop.f32.mrf.mxu0
  %231 = vdwg.mxu0
  %v232 = vld [vmem:[%s4] sm:$0xff]
  %v233 = vld [vmem:[%s4 + $0x8] sm:$0xff]
  %v234 = vld [vmem:[%s4 + $0x10] sm:$0xff]
  %v235 = vld [vmem:[%s4 + $0x18] sm:$0xff]
  %v236 = vld [vmem:[%s5] sm:$0x3]
  %v238 = vlaneseq
  %v239 = vshrl.u32 %v238, 7
  %v240 = vsub.s32 0, %v239
  %v241 = vrot.slane %v236, %v240
  %v242 = vlaneseq
  %v243 = vshrl.u32 %v242, 7
  %v244 = vsub.s32 1, %v243
  %v245 = vrot.slane %v236, %v244
  %v249 = vsel %vm145, %v137, 0
  %v252 = vsel %vm145, %v142, 0
  %254 = vmatprep.subr.mxu0 0.0
  %255 = vmatpush1.msra.mxu0 0.0
  %256 = vmatprep.subr.mxu0 0.0
  %257 = vmatpush1.msra.mxu0 0.0
  %258 = vmatprep.subr.mxu0 0.0
  %259 = vmatpush1.msra.mxu0 0.0
  %260 = vmatprep.subr.mxu0 0.0
  %261 = vmatpush1.msra.mxu0 0.0
  %262 = vmatprep.subr.mxu0 0.0
  %263 = vmatpush1.msra.mxu0 0.0
  %264 = vmatprep.subr.mxu0 0.0
  %265 = vmatpush1.msra.mxu0 0.0
  %266 = vmatprep.subr.mxu0 0.0
  %267 = vmatpush1.msra.mxu0 0.0
  %268 = vmatprep.subr.mxu0 0.0
  %269 = vmatpush1.msra.mxu0 0.0
  %270 = vmatprep.subr.mxu0 0.0
  %271 = vmatpush1.msra.mxu0 0.0
  %272 = vmatprep.subr.mxu0 0.0
  %273 = vmatpush1.msra.mxu0 0.0
  %274 = vmatprep.subr.mxu0 0.0
  %275 = vmatpush1.msra.mxu0 0.0
  %276 = vmatprep.subr.mxu0 0.0
  %277 = vmatpush1.msra.mxu0 0.0
  %278 = vmatprep.subr.mxu0 0.0
  %279 = vmatpush1.msra.mxu0 0.0
  %280 = vmatprep.subr.mxu0 0.0
  %281 = vmatpush1.msra.mxu0 0.0
  %282 = vmatprep.subr.mxu0 %v235
  %283 = vmatpush1.msra.mxu0 %v234
  %284 = vmatprep.subr.mxu0 %v233
  %285 = vmatpush1.msra.mxu0 %v232
  %286 = vmatprep.subr.mxu0 0.0
  %287 = vmatpush2.msra.mxu0 0.0
  %288 = vmatprep.subr.mxu0 0.0
  %289 = vmatpush2.msra.mxu0 0.0
  %290 = vmatprep.subr.mxu0 0.0
  %291 = vmatpush2.msra.mxu0 0.0
  %292 = vmatprep.subr.mxu0 0.0
  %293 = vmatpush2.msra.mxu0 0.0
  %294 = vmatprep.subr.mxu0 0.0
  %295 = vmatpush2.msra.mxu0 0.0
  %296 = vmatprep.subr.mxu0 0.0
  %297 = vmatpush2.msra.mxu0 0.0
  %298 = vmatprep.subr.mxu0 0.0
  %299 = vmatpush2.msra.mxu0 0.0
  %300 = vmatprep.subr.mxu0 0.0
  %301 = vmatpush2.msra.mxu0 0.0
  %302 = vmatprep.subr.mxu0 0.0
  %303 = vmatpush2.msra.mxu0 0.0
  %304 = vmatprep.subr.mxu0 0.0
  %305 = vmatpush2.msra.mxu0 0.0
  %306 = vmatprep.subr.mxu0 0.0
  %307 = vmatpush2.msra.mxu0 0.0
  %308 = vmatprep.subr.mxu0 0.0
  %309 = vmatpush2.msra.mxu0 0.0
  %310 = vmatprep.subr.mxu0 0.0
  %311 = vmatpush2.msra.mxu0 0.0
  %312 = vmatprep.subr.mxu0 0.0
  %313 = vmatpush2.msra.mxu0 0.0
  %314 = vmatprep.subr.mxu0 0.0
  %315 = vmatpush2.msra.mxu0 0.0
  %316 = vmatprep.subr.mxu0 0.0
  %317 = vmatpush2.msra.mxu0 0.0
  %318 = vmatprep.mubr.f32.mxu0 0.0
  %319 = vmatmul.mubr.f32.gmra.mxu0 %v249
  %v320 = vpop.f32.mrf.mxu0
  %v321 = vadd.f32 %v241, %v320
  %v322 = vpop.f32.mrf.mxu0
  %v323 = vadd.f32 %v245, %v322
  %324 = vmatprep.mubr.f32.mxu0 0.0
  %325 = vmatmul.mubr.f32.gmra.mxu0 %v252
  %v326 = vpop.f32.mrf.mxu0
  %v327 = vadd.f32 %v241, %v326
  %v328 = vpop.f32.mrf.mxu0
  %v329 = vadd.f32 %v245, %v328
  %330 = vdwg.mxu0
  %v331 = vld [vmem:[%s1] sm:$0xff]
  %v332 = vld [vmem:[%s1 + $0x8] sm:$0x3]
  %v333 = vmul.f32 %v323, 0.5
  %v334 = vmul.f32 %v329, 0.5
  %v335 = vmul.f32 %v333, 1.442695
  %v336 = vpow.pop %v335
  %v337 = vmul.f32 %v334, 1.442695
  %v338 = vpow.pop %v337
  %v339 = vmul.f32 %v331, %v336
  %v340 = vmul.f32 %v332, %v338
  %v341 = vadd.f32 %v321, %v339
  %v342 = vadd.f32 %v327, %v340
  %v343 = vld [vmem:[%s6] sm:$0xff]
  %v344 = vld [vmem:[%s6 + $0x8] sm:$0xff]
  %v345 = vld [vmem:[%s6 + $0x10] sm:$0xff]
  %v346 = vld [vmem:[%s6 + $0x18] sm:$0xff]
  %v347 = vld [vmem:[%s6 + $0x20] sm:$0xff]
  %v348 = vld [vmem:[%s6 + $0x28] sm:$0xff]
  %v349 = vld [vmem:[%s6 + $0x30] sm:$0xff]
  %v350 = vld [vmem:[%s6 + $0x38] sm:$0xff]
  %v351 = vld [vmem:[%s6 + $0x40] sm:$0xff]
  %v352 = vld [vmem:[%s6 + $0x48] sm:$0xff]
  %v353 = vld [vmem:[%s6 + $0x50] sm:$0xff]
  %v354 = vld [vmem:[%s6 + $0x58] sm:$0xff]
  %v355 = vld [vmem:[%s6 + $0x60] sm:$0xff]
  %v356 = vld [vmem:[%s6 + $0x68] sm:$0xff]
  %v357 = vld [vmem:[%s6 + $0x70] sm:$0xff]
  %v358 = vld [vmem:[%s6 + $0x78] sm:$0xff]
  %359 = vmatprep.subr.mxu0 0.0
  %360 = vmatpush1.msra.mxu0 %v358
  %361 = vmatprep.subr.mxu0 0.0
  %362 = vmatpush1.msra.mxu0 %v357
  %363 = vmatprep.subr.mxu0 0.0
  %364 = vmatpush1.msra.mxu0 %v356
  %365 = vmatprep.subr.mxu0 0.0
  %366 = vmatpush1.msra.mxu0 %v355
  %367 = vmatprep.subr.mxu0 0.0
  %368 = vmatpush1.msra.mxu0 %v354
  %369 = vmatprep.subr.mxu0 0.0
  %370 = vmatpush1.msra.mxu0 %v353
  %371 = vmatprep.subr.mxu0 0.0
  %372 = vmatpush1.msra.mxu0 %v352
  %373 = vmatprep.subr.mxu0 0.0
  %374 = vmatpush1.msra.mxu0 %v351
  %375 = vmatprep.subr.mxu0 0.0
  %376 = vmatpush1.msra.mxu0 %v350
  %377 = vmatprep.subr.mxu0 0.0
  %378 = vmatpush1.msra.mxu0 %v349
  %379 = vmatprep.subr.mxu0 0.0
  %380 = vmatpush1.msra.mxu0 %v348
  %381 = vmatprep.subr.mxu0 0.0
  %382 = vmatpush1.msra.mxu0 %v347
  %383 = vmatprep.subr.mxu0 0.0
  %384 = vmatpush1.msra.mxu0 %v346
  %385 = vmatprep.subr.mxu0 0.0
  %386 = vmatpush1.msra.mxu0 %v345
  %387 = vmatprep.subr.mxu0 0.0
  %388 = vmatpush1.msra.mxu0 %v344
  %389 = vmatprep.subr.mxu0 0.0
  %390 = vmatpush1.msra.mxu0 %v343
  %391 = vmatprep.subr.mxu0 0.0
  %392 = vmatpush2.msra.mxu0 0.0
  %393 = vmatprep.subr.mxu0 0.0
  %394 = vmatpush2.msra.mxu0 0.0
  %395 = vmatprep.subr.mxu0 0.0
  %396 = vmatpush2.msra.mxu0 0.0
  %397 = vmatprep.subr.mxu0 0.0
  %398 = vmatpush2.msra.mxu0 0.0
  %399 = vmatprep.subr.mxu0 0.0
  %400 = vmatpush2.msra.mxu0 0.0
  %401 = vmatprep.subr.mxu0 0.0
  %402 = vmatpush2.msra.mxu0 0.0
  %403 = vmatprep.subr.mxu0 0.0
  %404 = vmatpush2.msra.mxu0 0.0
  %405 = vmatprep.subr.mxu0 0.0
  %406 = vmatpush2.msra.mxu0 0.0
  %407 = vmatprep.subr.mxu0 0.0
  %408 = vmatpush2.msra.mxu0 0.0
  %409 = vmatprep.subr.mxu0 0.0
  %410 = vmatpush2.msra.mxu0 0.0
  %411 = vmatprep.subr.mxu0 0.0
  %412 = vmatpush2.msra.mxu0 0.0
  %413 = vmatprep.subr.mxu0 0.0
  %414 = vmatpush2.msra.mxu0 0.0
  %415 = vmatprep.subr.mxu0 0.0
  %416 = vmatpush2.msra.mxu0 0.0
  %417 = vmatprep.subr.mxu0 0.0
  %418 = vmatpush2.msra.mxu0 0.0
  %419 = vmatprep.subr.mxu0 0.0
  %420 = vmatpush2.msra.mxu0 0.0
  %421 = vmatprep.subr.mxu0 0.0
  %422 = vmatpush2.msra.mxu0 0.0
  %423 = vmatprep.mubr.f32.mxu0 0.0
  %424 = vmatmul.mubr.f32.gmra.mxu0 %v341
  %v425 = vpop.f32.mrf.mxu0
  %v426 = vadd.f32 0.0, %v425
  %v427 = vpop.f32.mrf.mxu0
  %428 = vmatprep.mubr.f32.mxu0 0.0
  %429 = vmatmul.mubr.f32.gmra.mxu0 %v342
  %v430 = vpop.f32.mrf.mxu0
  %v431 = vadd.f32 0.0, %v430
  %v432 = vpop.f32.mrf.mxu0
  %433 = vdwg.mxu0
  %v434 = vld [vmem:[%s7] sm:$0xff]
  %v435 = vld [vmem:[%s7 + $0x8] sm:$0x3]
  %v436 = vmul.f32 %v426, %v434
  %v437 = vmul.f32 %v431, %v435
  %v438 = vld [vmem:[%s8] sm:$0xff]
  %v439 = vld [vmem:[%s8 + $0x8] sm:$0xff]
  %v440 = vld [vmem:[%s8 + $0x10] sm:$0xf]
  %vm441 = vcmask 162816
  %v443 = vsel %vm441, %v436, 0
  %v446 = vsel %vm441, %v437, 0
  %vm448 = vcmask 1043456
  %v450 = vsel %vm448, %v440, 0
  %452 = vmatprep.subr.mxu0 0.0
  %453 = vmatpush1.msra.mxu0 0.0
  %454 = vmatprep.subr.mxu0 0.0
  %455 = vmatpush1.msra.mxu0 0.0
  %456 = vmatprep.subr.mxu0 0.0
  %457 = vmatpush1.msra.mxu0 0.0
  %458 = vmatprep.subr.mxu0 0.0
  %459 = vmatpush1.msra.mxu0 0.0
  %460 = vmatprep.subr.mxu0 0.0
  %461 = vmatpush1.msra.mxu0 0.0
  %462 = vmatprep.subr.mxu0 0.0
  %463 = vmatpush1.msra.mxu0 0.0
  %464 = vmatprep.subr.mxu0 0.0
  %465 = vmatpush1.msra.mxu0 0.0
  %466 = vmatprep.subr.mxu0 0.0
  %467 = vmatpush1.msra.mxu0 0.0
  %468 = vmatprep.subr.mxu0 0.0
  %469 = vmatpush1.msra.mxu0 0.0
  %470 = vmatprep.subr.mxu0 0.0
  %471 = vmatpush1.msra.mxu0 0.0
  %472 = vmatprep.subr.mxu0 0.0
  %473 = vmatpush1.msra.mxu0 0.0
  %474 = vmatprep.subr.mxu0 0.0
  %475 = vmatpush1.msra.mxu0 0.0
  %476 = vmatprep.subr.mxu0 0.0
  %477 = vmatpush1.msra.mxu0 0.0
  %478 = vmatprep.subr.mxu0 0.0
  %479 = vmatpush1.msra.mxu0 %v450
  %480 = vmatprep.subr.mxu0 0.0
  %481 = vmatpush1.msra.mxu0 %v439
  %482 = vmatprep.subr.mxu0 0.0
  %483 = vmatpush1.msra.mxu0 %v438
  %484 = vmatprep.subr.mxu0 0.0
  %485 = vmatpush2.msra.mxu0 0.0
  %486 = vmatprep.subr.mxu0 0.0
  %487 = vmatpush2.msra.mxu0 0.0
  %488 = vmatprep.subr.mxu0 0.0
  %489 = vmatpush2.msra.mxu0 0.0
  %490 = vmatprep.subr.mxu0 0.0
  %491 = vmatpush2.msra.mxu0 0.0
  %492 = vmatprep.subr.mxu0 0.0
  %493 = vmatpush2.msra.mxu0 0.0
  %494 = vmatprep.subr.mxu0 0.0
  %495 = vmatpush2.msra.mxu0 0.0
  %496 = vmatprep.subr.mxu0 0.0
  %497 = vmatpush2.msra.mxu0 0.0
  %498 = vmatprep.subr.mxu0 0.0
  %499 = vmatpush2.msra.mxu0 0.0
  %500 = vmatprep.subr.mxu0 0.0
  %501 = vmatpush2.msra.mxu0 0.0
  %502 = vmatprep.subr.mxu0 0.0
  %503 = vmatpush2.msra.mxu0 0.0
  %504 = vmatprep.subr.mxu0 0.0
  %505 = vmatpush2.msra.mxu0 0.0
  %506 = vmatprep.subr.mxu0 0.0
  %507 = vmatpush2.msra.mxu0 0.0
  %508 = vmatprep.subr.mxu0 0.0
  %509 = vmatpush2.msra.mxu0 0.0
  %510 = vmatprep.subr.mxu0 0.0
  %511 = vmatpush2.msra.mxu0 0.0
  %512 = vmatprep.subr.mxu0 0.0
  %513 = vmatpush2.msra.mxu0 0.0
  %514 = vmatprep.subr.mxu0 0.0
  %515 = vmatpush2.msra.mxu0 0.0
  %516 = vmatprep.mubr.f32.mxu0 0.0
  %517 = vmatmul.mubr.f32.gmra.mxu0 %v443
  %v518 = vpop.f32.mrf.mxu0
  %v519 = vadd.f32 0.0, %v518
  %v520 = vpop.f32.mrf.mxu0
  %521 = vmatprep.mubr.f32.mxu0 0.0
  %522 = vmatmul.mubr.f32.gmra.mxu0 %v446
  %v523 = vpop.f32.mrf.mxu0
  %v524 = vadd.f32 0.0, %v523
  %v525 = vpop.f32.mrf.mxu0
  %526 = vdwg.mxu0
  %v527 = vld [vmem:[%s9] sm:$0x3]
  %v528 = vld [vmem:[%s10] sm:$0x1]
  %v530 = vlaneseq
  %v531 = vshrl.u32 %v530, 7
  %v532 = vsub.s32 0, %v531
  %v533 = vrot.slane %v528, %v532
  %vm535 = vcmask 80896
  %v537 = vsel %vm535, %v527, 0
  %vm539 = vcmask 1041408
  %v541 = vsel %vm539, %v524, 0
  %543 = vmatprep.subr.mxu0 0.0
  %544 = vmatpush1.msra.mxu0 0.0
  %545 = vmatprep.subr.mxu0 0.0
  %546 = vmatpush1.msra.mxu0 0.0
  %547 = vmatprep.subr.mxu0 0.0
  %548 = vmatpush1.msra.mxu0 0.0
  %549 = vmatprep.subr.mxu0 0.0
  %550 = vmatpush1.msra.mxu0 0.0
  %551 = vmatprep.subr.mxu0 0.0
  %552 = vmatpush1.msra.mxu0 0.0
  %553 = vmatprep.subr.mxu0 0.0
  %554 = vmatpush1.msra.mxu0 0.0
  %555 = vmatprep.subr.mxu0 0.0
  %556 = vmatpush1.msra.mxu0 0.0
  %557 = vmatprep.subr.mxu0 0.0
  %558 = vmatpush1.msra.mxu0 0.0
  %559 = vmatprep.subr.mxu0 0.0
  %560 = vmatpush1.msra.mxu0 0.0
  %561 = vmatprep.subr.mxu0 0.0
  %562 = vmatpush1.msra.mxu0 0.0
  %563 = vmatprep.subr.mxu0 0.0
  %564 = vmatpush1.msra.mxu0 0.0
  %565 = vmatprep.subr.mxu0 0.0
  %566 = vmatpush1.msra.mxu0 0.0
  %567 = vmatprep.subr.mxu0 0.0
  %568 = vmatpush1.msra.mxu0 0.0
  %569 = vmatprep.subr.mxu0 0.0
  %570 = vmatpush1.msra.mxu0 0.0
  %571 = vmatprep.subr.mxu0 0.0
  %572 = vmatpush1.msra.mxu0 %v541
  %573 = vmatprep.subr.mxu0 0.0
  %574 = vmatpush1.msra.mxu0 %v519
  %575 = vmatprep.subr.mxu0 0.0
  %576 = vmatpush2.msra.mxu0 0.0
  %577 = vmatprep.subr.mxu0 0.0
  %578 = vmatpush2.msra.mxu0 0.0
  %579 = vmatprep.subr.mxu0 0.0
  %580 = vmatpush2.msra.mxu0 0.0
  %581 = vmatprep.subr.mxu0 0.0
  %582 = vmatpush2.msra.mxu0 0.0
  %583 = vmatprep.subr.mxu0 0.0
  %584 = vmatpush2.msra.mxu0 0.0
  %585 = vmatprep.subr.mxu0 0.0
  %586 = vmatpush2.msra.mxu0 0.0
  %587 = vmatprep.subr.mxu0 0.0
  %588 = vmatpush2.msra.mxu0 0.0
  %589 = vmatprep.subr.mxu0 0.0
  %590 = vmatpush2.msra.mxu0 0.0
  %591 = vmatprep.subr.mxu0 0.0
  %592 = vmatpush2.msra.mxu0 0.0
  %593 = vmatprep.subr.mxu0 0.0
  %594 = vmatpush2.msra.mxu0 0.0
  %595 = vmatprep.subr.mxu0 0.0
  %596 = vmatpush2.msra.mxu0 0.0
  %597 = vmatprep.subr.mxu0 0.0
  %598 = vmatpush2.msra.mxu0 0.0
  %599 = vmatprep.subr.mxu0 0.0
  %600 = vmatpush2.msra.mxu0 0.0
  %601 = vmatprep.subr.mxu0 0.0
  %602 = vmatpush2.msra.mxu0 0.0
  %603 = vmatprep.subr.mxu0 0.0
  %604 = vmatpush2.msra.mxu0 0.0
  %605 = vmatprep.subr.mxu0 0.0
  %606 = vmatpush2.msra.mxu0 0.0
  %607 = vmatprep.mubr.f32.mxu0 0.0
  %608 = vmatmul.mubr.f32.gmra.mxu0 %v537
  %v609 = vpop.f32.mrf.mxu0
  %v610 = vadd.f32 %v533, %v609
  %v611 = vpop.f32.mrf.mxu0
  %612 = vdwg.mxu0
  %v613 = vmul.f32 %v610, 0.5
  %v614 = vtanh.pop %v613
  %v615 = vadd.f32 %v614, 1.0
  %v616 = vmul.f32 %v615, 0.5
  %v617 = vld [vmem:[%s11] sm:$0xf]
  %v618 = vld [vmem:[%s12] sm:$0x1]
  %v620 = vlaneseq
  %v621 = vshrl.u32 %v620, 7
  %v622 = vsub.s32 0, %v621
  %v623 = vrot.slane %v618, %v622
  %vm625 = vcmask 31744
  %v627 = vsel %vm625, %v616, 0
  %v630 = vsel %vm448, %v617, 0
  %632 = vmatprep.subr.mxu0 0.0
  %633 = vmatpush1.msra.mxu0 0.0
  %634 = vmatprep.subr.mxu0 0.0
  %635 = vmatpush1.msra.mxu0 0.0
  %636 = vmatprep.subr.mxu0 0.0
  %637 = vmatpush1.msra.mxu0 0.0
  %638 = vmatprep.subr.mxu0 0.0
  %639 = vmatpush1.msra.mxu0 0.0
  %640 = vmatprep.subr.mxu0 0.0
  %641 = vmatpush1.msra.mxu0 0.0
  %642 = vmatprep.subr.mxu0 0.0
  %643 = vmatpush1.msra.mxu0 0.0
  %644 = vmatprep.subr.mxu0 0.0
  %645 = vmatpush1.msra.mxu0 0.0
  %646 = vmatprep.subr.mxu0 0.0
  %647 = vmatpush1.msra.mxu0 0.0
  %648 = vmatprep.subr.mxu0 0.0
  %649 = vmatpush1.msra.mxu0 0.0
  %650 = vmatprep.subr.mxu0 0.0
  %651 = vmatpush1.msra.mxu0 0.0
  %652 = vmatprep.subr.mxu0 0.0
  %653 = vmatpush1.msra.mxu0 0.0
  %654 = vmatprep.subr.mxu0 0.0
  %655 = vmatpush1.msra.mxu0 0.0
  %656 = vmatprep.subr.mxu0 0.0
  %657 = vmatpush1.msra.mxu0 0.0
  %658 = vmatprep.subr.mxu0 0.0
  %659 = vmatpush1.msra.mxu0 0.0
  %660 = vmatprep.subr.mxu0 0.0
  %661 = vmatpush1.msra.mxu0 0.0
  %662 = vmatprep.subr.mxu0 0.0
  %663 = vmatpush1.msra.mxu0 %v630
  %664 = vmatprep.subr.mxu0 0.0
  %665 = vmatpush2.msra.mxu0 0.0
  %666 = vmatprep.subr.mxu0 0.0
  %667 = vmatpush2.msra.mxu0 0.0
  %668 = vmatprep.subr.mxu0 0.0
  %669 = vmatpush2.msra.mxu0 0.0
  %670 = vmatprep.subr.mxu0 0.0
  %671 = vmatpush2.msra.mxu0 0.0
  %672 = vmatprep.subr.mxu0 0.0
  %673 = vmatpush2.msra.mxu0 0.0
  %674 = vmatprep.subr.mxu0 0.0
  %675 = vmatpush2.msra.mxu0 0.0
  %676 = vmatprep.subr.mxu0 0.0
  %677 = vmatpush2.msra.mxu0 0.0
  %678 = vmatprep.subr.mxu0 0.0
  %679 = vmatpush2.msra.mxu0 0.0
  %680 = vmatprep.subr.mxu0 0.0
  %681 = vmatpush2.msra.mxu0 0.0
  %682 = vmatprep.subr.mxu0 0.0
  %683 = vmatpush2.msra.mxu0 0.0
  %684 = vmatprep.subr.mxu0 0.0
  %685 = vmatpush2.msra.mxu0 0.0
  %686 = vmatprep.subr.mxu0 0.0
  %687 = vmatpush2.msra.mxu0 0.0
  %688 = vmatprep.subr.mxu0 0.0
  %689 = vmatpush2.msra.mxu0 0.0
  %690 = vmatprep.subr.mxu0 0.0
  %691 = vmatpush2.msra.mxu0 0.0
  %692 = vmatprep.subr.mxu0 0.0
  %693 = vmatpush2.msra.mxu0 0.0
  %694 = vmatprep.subr.mxu0 0.0
  %695 = vmatpush2.msra.mxu0 0.0
  %696 = vmatprep.mubr.f32.mxu0 0.0
  %697 = vmatmul.mubr.f32.gmra.mxu0 %v627
  %v698 = vpop.f32.mrf.mxu0
  %v699 = vadd.f32 %v623, %v698
  %v700 = vpop.f32.mrf.mxu0
  %701 = vdwg.mxu0
  %702 = vst [vmem:[%s15] sm:$0x3] %v699
  %703 = vst [vmem:[%s15 + $0x2] sm:$0x1] %v229
  // Predicated region
  $region62: #{vae_lr_forward.1} parent=0 // pred_check
    _
  $region63: #{vae_lr_forward.1} parent=0 // pred_check_branch
    %705 = sbr.rel (0) target = $region65
  $region64: #{vae_lr_forward.1} parent=0 // pred_region
    _
  $region65: #{vae_lr_forward.1} parent=0 // pred_fallthru
    _
  // Predicated region
  $region66: #{vae_lr_forward.1} parent=0 // pred_check
    _
  $region67: #{vae_lr_forward.1} parent=0 // pred_check_branch
    %707 = sbr.rel (0) target = $region69
  $region68: #{vae_lr_forward.1} parent=0 // pred_region
    _
  $region69: #{vae_lr_forward.1} parent=0 // pred_fallthru
    _

</llo_original>
